<compile_context>
chip_gen: v6e
topology: v6e:2x2x1
jax: 0.10.0
libtpu: 0.0.40
codegen_flags: <defaults>
</compile_context>

<pallas_src>
import functools

import jax
import jax.numpy as jnp
from jax.experimental import pallas as pl
from jax.experimental.pallas import tpu as pltpu

_LANE = 128
_NEG_INF = jnp.float32(-1e30)


def _round_up(x, m):
    return ((x + m - 1) // m) * m


def _mlp_kernel(x_ref, w1_ref, b1_ref, w2_ref, b2_ref, logp_ref):
    # ---- hidden layer: tanh(x @ W1 + b1) ------------------------------------
    x = x_ref[...].astype(jnp.bfloat16)                       # (TB, n_in)
    h = jnp.dot(x, w1_ref[...], preferred_element_type=jnp.float32)
    h = jnp.tanh(h + b1_ref[...])                             # (TB, H_pad) f32

    # ---- logistic layer ------------------------------------------------------
    logits = jnp.dot(h.astype(jnp.bfloat16), w2_ref[...],
                     preferred_element_type=jnp.float32)
    logits = logits + b2_ref[...]                             # (TB, O_pad) f32
    # Padded class columns have bias -1e30 -> exp underflows to 0, so the
    # log_softmax over the full 128-lane slab equals log_softmax over the
    # real n_out classes.
    m = jnp.max(logits, axis=1, keepdims=True)
    z = logits - m
    lse = jnp.log(jnp.sum(jnp.exp(z), axis=1, keepdims=True))
    logp_ref[...] = z - lse                                   # lane-dense store


def prepare_kernel_params(w1, b1, w2, b2):
    """One-time conversion from PyTorch layout to the kernel layout.

    w1: (n_hidden, n_in), w2: (n_out, n_hidden)  ->  (in, out), lane-padded,
    bf16 weights / f32 biases.  Call this at param-load time, not per forward.
    """
    n_hidden, n_in = w1.shape
    n_out = w2.shape[0]
    h_pad = _round_up(n_hidden, _LANE)
    o_pad = _round_up(n_out, _LANE)

    w1p = jnp.zeros((n_in, h_pad), jnp.bfloat16)
    w1p = w1p.at[:, :n_hidden].set(jnp.transpose(w1).astype(jnp.bfloat16))
    b1p = jnp.zeros((1, h_pad), jnp.float32)
    b1p = b1p.at[0, :n_hidden].set(b1.astype(jnp.float32))

    w2p = jnp.zeros((h_pad, o_pad), jnp.bfloat16)
    w2p = w2p.at[:n_hidden, :n_out].set(jnp.transpose(w2).astype(jnp.bfloat16))
    b2p = jnp.full((1, o_pad), _NEG_INF, jnp.float32)
    b2p = b2p.at[0, :n_out].set(b2.astype(jnp.float32))
    return w1p, b1p, w2p, b2p


def _choose_tile_b(B):
    # Big tiles amortize per-step overhead; fall back to one full-batch block
    # (always a legal block shape) when B has no nice divisor.
    for t in (512, 256, 128, 64, 32, 16, 8):
        if B % t == 0:
            return t
    return B


@functools.partial(jax.jit, static_argnames=("n_out",))
def mlp_forward(x, w1p, b1p, w2p, b2p, *, n_out):
    """x: (B, n_in) f32.  w1p/b1p/w2p/b2p from prepare_kernel_params.

    Returns (pred_prop, pred_cate): log-probs (B, n_out) f32 and argmax
    class indices (B,) int32 (PyTorch returns int64; int32 is TPU-native).
    """
    B, n_in = x.shape
    h_pad = w1p.shape[1]
    o_pad = w2p.shape[1]
    tile_b = _choose_tile_b(B)
    grid = (B // tile_b,)

    logp_pad = pl.pallas_call(
        _mlp_kernel,
        out_shape=jax.ShapeDtypeStruct((B, o_pad), jnp.float32),
        grid_spec=pltpu.PrefetchScalarGridSpec(
            num_scalar_prefetch=0,
            grid=grid,
            in_specs=[
                pl.BlockSpec((tile_b, n_in), lambda i: (i, 0)),   # stream x rows
                pl.BlockSpec((n_in, h_pad), lambda i: (0, 0)),    # W1 resident
                pl.BlockSpec((1, h_pad), lambda i: (0, 0)),       # b1 resident
                pl.BlockSpec((h_pad, o_pad), lambda i: (0, 0)),   # W2 resident
                pl.BlockSpec((1, o_pad), lambda i: (0, 0)),       # b2 resident
            ],
            out_specs=pl.BlockSpec((tile_b, o_pad), lambda i: (i, 0)),
        ),
        compiler_params=pltpu.CompilerParams(
            dimension_semantics=("parallel",)),
    )(x, w1p, b1p, w2p, b2p)

    pred_prop = logp_pad[:, :n_out]
    pred_cate = jnp.argmax(pred_prop, axis=1).astype(jnp.int32)
    return pred_prop, pred_cate


def init_params(key, n_in, n_hidden, n_out):
    """PyTorch nn.Linear default init (uniform +/- 1/sqrt(fan_in)), torch layout."""
    k1, k2, k3, k4 = jax.random.split(key, 4)
    lim1 = 1.0 / jnp.sqrt(n_in)
    lim2 = 1.0 / jnp.sqrt(n_hidden)
    w1 = jax.random.uniform(k1, (n_hidden, n_in), jnp.float32, -lim1, lim1)
    b1 = jax.random.uniform(k2, (n_hidden,), jnp.float32, -lim1, lim1)
    w2 = jax.random.uniform(k3, (n_out, n_hidden), jnp.float32, -lim2, lim2)
    b2 = jax.random.uniform(k4, (n_out,), jnp.float32, -lim2, lim2)
    return w1, b1, w2, b2


if __name__ == "__main__":
    key = jax.random.PRNGKey(0)
    k_x, k_p = jax.random.split(key)

    B, n_in, n_hidden, n_out = 8, 32, 64, 8
    x = jax.random.normal(k_x, (B, n_in), jnp.float32)
    w1, b1, w2, b2 = init_params(k_p, n_in, n_hidden, n_out)

    # One-time weight re-layout (would live at param-load time in real code).
    w1p, b1p, w2p, b2p = prepare_kernel_params(w1, b1, w2, b2)

    pred_prop, pred_cate = mlp_forward(x, w1p, b1p, w2p, b2p, n_out=n_out)
    jax.block_until_ready((pred_prop, pred_cate))

    # Reference (pure JAX, f32) for sanity checks.
    h_ref = jnp.tanh(x @ w1.T + b1)
    logp_ref = jax.nn.log_softmax(h_ref @ w2.T + b2, axis=1)

    assert pred_prop.shape == (B, n_out)
    assert pred_cate.shape == (B,)
    row_lse = jax.scipy.special.logsumexp(pred_prop, axis=1)
    assert jnp.max(jnp.abs(row_lse)) < 1e-4                 # valid log-probs
    assert jnp.max(jnp.abs(pred_prop - logp_ref)) < 5e-2    # bf16-matmul tolerance
    assert jnp.all((pred_cate >= 0) & (pred_cate < n_out))

    print("KERNEL_OK")
</pallas_src>

<mosaic_0001>
module attributes {stable_mosaic.version = 11 : i64} {
  func.func @_mlp_kernel(%arg0: i32, %arg1: memref<8x32xf32, #tpu.memory_space<vmem>>, %arg2: memref<32x128xbf16, #tpu.memory_space<vmem>>, %arg3: memref<1x128xf32, #tpu.memory_space<vmem>>, %arg4: memref<128x128xbf16, #tpu.memory_space<vmem>>, %arg5: memref<1x128xf32, #tpu.memory_space<vmem>>, %arg6: memref<8x128xf32, #tpu.memory_space<vmem>>) attributes {dimension_semantics = [#tpu.dimension_semantics<parallel>], iteration_bounds = array<i64: 1>, scalar_prefetch = 0 : i64, scratch_operands = 0 : i64, tpu.core_type = #tpu.core_type<tc>, window_params = [{transform_indices = @transform_0, window_bounds = array<i64: 8, 32>}, {pipeline_mode = #tpu.pipeline_mode<synchronous>, transform_indices = @transform_1, window_bounds = array<i64: 32, 128>}, {pipeline_mode = #tpu.pipeline_mode<synchronous>, transform_indices = @transform_2, window_bounds = array<i64: 1, 128>}, {pipeline_mode = #tpu.pipeline_mode<synchronous>, transform_indices = @transform_3, window_bounds = array<i64: 128, 128>}, {pipeline_mode = #tpu.pipeline_mode<synchronous>, transform_indices = @transform_4, window_bounds = array<i64: 1, 128>}, {transform_indices = @transform_5, window_bounds = array<i64: 8, 128>}]} {
    %c0 = arith.constant 0 : index
    %c0_0 = arith.constant 0 : index
    %0 = vector.load %arg1[%c0, %c0_0] : memref<8x32xf32, #tpu.memory_space<vmem>>, vector<8x32xf32>
    %1 = arith.truncf %0 : vector<8x32xf32> to vector<8x32xbf16>
    %c0_1 = arith.constant 0 : index
    %c0_2 = arith.constant 0 : index
    %2 = vector.load %arg2[%c0_1, %c0_2] : memref<32x128xbf16, #tpu.memory_space<vmem>>, vector<32x128xbf16>
    %cst = arith.constant dense<0.000000e+00> : vector<8x128xf32>
    %3 = tpu.matmul %1, %2, %cst {dimension_numbers = #tpu.dot_dimension_numbers<[1], [0], [0], [1], [0, 0, 1, 1], [], []>} : vector<8x32xbf16>, vector<32x128xbf16>, vector<8x128xf32> -> vector<8x128xf32>
    %c0_3 = arith.constant 0 : index
    %c0_4 = arith.constant 0 : index
    %4 = vector.load %arg3[%c0_3, %c0_4] : memref<1x128xf32, #tpu.memory_space<vmem>>, vector<1x128xf32>
    %5 = vector.broadcast %4 : vector<1x128xf32> to vector<8x128xf32>
    %6 = arith.addf %3, %5 : vector<8x128xf32>
    %7 = math.tanh %6 : vector<8x128xf32>
    %8 = arith.truncf %7 : vector<8x128xf32> to vector<8x128xbf16>
    %c0_5 = arith.constant 0 : index
    %c0_6 = arith.constant 0 : index
    %9 = vector.load %arg4[%c0_5, %c0_6] : memref<128x128xbf16, #tpu.memory_space<vmem>>, vector<128x128xbf16>
    %cst_7 = arith.constant dense<0.000000e+00> : vector<8x128xf32>
    %10 = tpu.matmul %8, %9, %cst_7 {dimension_numbers = #tpu.dot_dimension_numbers<[1], [0], [0], [1], [0, 0, 1, 1], [], []>} : vector<8x128xbf16>, vector<128x128xbf16>, vector<8x128xf32> -> vector<8x128xf32>
    %c0_8 = arith.constant 0 : index
    %c0_9 = arith.constant 0 : index
    %11 = vector.load %arg5[%c0_8, %c0_9] : memref<1x128xf32, #tpu.memory_space<vmem>>, vector<1x128xf32>
    %12 = vector.broadcast %11 : vector<1x128xf32> to vector<8x128xf32>
    %13 = arith.addf %10, %12 : vector<8x128xf32>
    %cst_10 = arith.constant dense<0xFF800000> : vector<8xf32>
    %14 = vector.multi_reduction <maximumf>, %13, %cst_10 [1] : vector<8x128xf32> to vector<8xf32>
    %15 = vector.shape_cast %14 : vector<8xf32> to vector<8x1xf32>
    %16 = vector.broadcast %15 : vector<8x1xf32> to vector<8x128xf32>
    %17 = arith.subf %13, %16 : vector<8x128xf32>
    %18 = math.exp %17 : vector<8x128xf32>
    %cst_11 = arith.constant dense<0.000000e+00> : vector<8xf32>
    %19 = vector.multi_reduction <add>, %18, %cst_11 [1] : vector<8x128xf32> to vector<8xf32>
    %20 = vector.shape_cast %19 : vector<8xf32> to vector<8x1xf32>
    %21 = math.log %20 : vector<8x1xf32>
    %22 = vector.broadcast %21 : vector<8x1xf32> to vector<8x128xf32>
    %23 = arith.subf %17, %22 : vector<8x128xf32>
    %c0_12 = arith.constant 0 : index
    %c0_13 = arith.constant 0 : index
    %24 = vector.load %arg6[%c0_12, %c0_13] : memref<8x128xf32, #tpu.memory_space<vmem>>, vector<8x128xf32>
    tpu.vector_store %arg6[%c0_12, %c0_13], %23 {strides = array<i32>} : memref<8x128xf32, #tpu.memory_space<vmem>>, vector<8x128xf32>,
    return
  }
  func.func @transform_0(%arg0: i32) -> (i32, i32) {
    %c0_i32 = arith.constant 0 : i32
    %c0_i32_0 = arith.constant 0 : i32
    return %arg0, %c0_i32 : i32, i32
  }
  func.func @transform_1(%arg0: i32) -> (i32, i32) {
    %c0_i32 = arith.constant 0 : i32
    %c0_i32_0 = arith.constant 0 : i32
    %c0_i32_1 = arith.constant 0 : i32
    return %c0_i32, %c0_i32_0 : i32, i32
  }
  func.func @transform_2(%arg0: i32) -> (i32, i32) {
    %c0_i32 = arith.constant 0 : i32
    %c0_i32_0 = arith.constant 0 : i32
    %c0_i32_1 = arith.constant 0 : i32
    return %c0_i32, %c0_i32_0 : i32, i32
  }
  func.func @transform_3(%arg0: i32) -> (i32, i32) {
    %c0_i32 = arith.constant 0 : i32
    %c0_i32_0 = arith.constant 0 : i32
    %c0_i32_1 = arith.constant 0 : i32
    return %c0_i32, %c0_i32_0 : i32, i32
  }
  func.func @transform_4(%arg0: i32) -> (i32, i32) {
    %c0_i32 = arith.constant 0 : i32
    %c0_i32_0 = arith.constant 0 : i32
    %c0_i32_1 = arith.constant 0 : i32
    return %c0_i32, %c0_i32_0 : i32, i32
  }
  func.func @transform_5(%arg0: i32) -> (i32, i32) {
    %c0_i32 = arith.constant 0 : i32
    %c0_i32_0 = arith.constant 0 : i32
    return %arg0, %c0_i32 : i32, i32
  }
}

</mosaic_0001>

<llo_original>
// kernel: mlp_forward.1
$region0: #{mlp_forward.1}
  #allocation0 [shape = 'u32[]', space=smem, size = 0x4, offset = 0x4, fixed_abs, tag = 'smem constant byte address 0x4 - core index']
  #allocation1 [shape = 'u32[144,128]{1,0:T(1,128)}', space=vmem, size = 0x12000, scoped, tag = 'internal scratch']
  %s0 = inlined_call_operand.hbm [shape: f32[8,32], index: 0, kind: input, shape index: {}]
  %s1 = inlined_call_operand.hbm [shape: bf16[32,128], index: 1, kind: input, shape index: {}]
  %s2 = inlined_call_operand.vmem [shape: f32[1,128], index: 2, kind: input, shape index: {}]
  %s3 = inlined_call_operand.hbm [shape: bf16[128,128], index: 3, kind: input, shape index: {}]
  %s4 = inlined_call_operand.vmem [shape: f32[1,128], index: 4, kind: input, shape index: {}]
  %s5 = inlined_call_operand.vmem [shape: f32[8,128], index: 5, kind: output, shape index: {}]
  %s6 = sld [smem:[#allocation0]]
  $region42: #{mlp_forward.1} parent=0
    _
  %s8 = ssub.s32 1, %s6
  %s9 = scalar_select 0, %s8, %s6
  $region1: #{mlp_forward.1} parent=0
    #allocation2 [shape = 'u8[4096]{0}', space=vmem, size = 0x1000, scoped, tag = 'input window, operand 0, single buffered']
    #allocation3 [shape = 's32[1]{0}', space=sflag, size = 0x4, scoped, tag = 'scoped memory for mlp_forward.1']
    #allocation4 [shape = 'u8[8192]{0}', space=vmem, size = 0x2000, scoped, tag = 'input window, operand 1, single buffered']
    #allocation5 [shape = 's32[1]{0}', space=sflag, size = 0x4, scoped, tag = 'scoped memory for mlp_forward.1']
    #allocation6 [shape = 'u8[32768]{0}', space=vmem, size = 0x8000, scoped, tag = 'input window, operand 3, single buffered']
    %10 = vsyncpa [#allocation3], 0
    %11 = vsyncpa [#allocation5], 0
    // Predicated region
    $region2: #{mlp_forward.1} parent=1 // pred_check
      _
    $region3: #{mlp_forward.1} parent=1 // pred_check_branch
      %13 = sbr.rel (0) target = $region5
    $region4: #{mlp_forward.1} parent=1 // pred_region
      %s15 = ssub.s32 128, 128
      %16 = vsyncadd [#allocation3], %s15
      %s18 = sshll.u32 [#allocation2], 4
      %s19 = int_to_ptr.vmem [resolvable:$true] %s18
      %21 = dma.hbm_to_vmem [thread:$0]  %s0, 128, %s19, [#allocation3]
    $region5: #{mlp_forward.1} parent=1 // pred_fallthru
      _
    // Predicated region
    $region6: #{mlp_forward.1} parent=1 // pred_check
      _
    $region7: #{mlp_forward.1} parent=1 // pred_check_branch
      %23 = sbr.rel (0) target = $region9
    $region8: #{mlp_forward.1} parent=1 // pred_region
      %s25 = ssub.s32 256, 256
      %26 = vsyncadd [#allocation5], %s25
      %s27 = sshll.u32 [#allocation4], 4
      %s28 = int_to_ptr.vmem [resolvable:$true] %s27
      %33 = dma.hbm_to_vmem [thread:$0]  %s1, 256, %s28, [#allocation5], 64, 64, 4
    $region9: #{mlp_forward.1} parent=1 // pred_fallthru
      _
    // Predicated region
    $region10: #{mlp_forward.1} parent=1 // pred_check
      _
    $region11: #{mlp_forward.1} parent=1 // pred_check_branch
      %35 = sbr.rel (0) target = $region13
    $region12: #{mlp_forward.1} parent=1 // pred_region
      _
    $region13: #{mlp_forward.1} parent=1 // pred_fallthru
      _
    // Predicated region
    $region14: #{mlp_forward.1} parent=1 // pred_check
      _
    $region15: #{mlp_forward.1} parent=1 // pred_check_branch
      %37 = sbr.rel (0) target = $region17
    $region16: #{mlp_forward.1} parent=1 // pred_region
      %s39 = ssub.s32 1024, 1024
      %40 = vsyncadd [#allocation5], %s39
      %s41 = sshll.u32 [#allocation6], 4
      %s42 = int_to_ptr.vmem [resolvable:$true] %s41
      %47 = dma.hbm_to_vmem [thread:$0]  %s3, 1024, %s42, [#allocation5], 64, 64, 4
    $region17: #{mlp_forward.1} parent=1 // pred_fallthru
      _
    // Predicated region
    $region18: #{mlp_forward.1} parent=1 // pred_check
      _
    $region19: #{mlp_forward.1} parent=1 // pred_check_branch
      %49 = sbr.rel (0) target = $region21
    $region20: #{mlp_forward.1} parent=1 // pred_region
      _
    $region21: #{mlp_forward.1} parent=1 // pred_fallthru
      _
    // Predicated region
    $region22: #{mlp_forward.1} parent=1 // pred_check
      _
    $region23: #{mlp_forward.1} parent=1 // pred_check_branch
      %51 = sbr.rel (0) target = $region25
    $region24: #{mlp_forward.1} parent=1 // pred_region
      %52 = dma.done [#allocation3], 128
    $region25: #{mlp_forward.1} parent=1 // pred_fallthru
      _
    // Predicated region
    $region26: #{mlp_forward.1} parent=1 // pred_check
      _
    $region27: #{mlp_forward.1} parent=1 // pred_check_branch
      %54 = sbr.rel (0) target = $region29
    $region28: #{mlp_forward.1} parent=1 // pred_region
      %55 = dma.done [#allocation5], 256
    $region29: #{mlp_forward.1} parent=1 // pred_fallthru
      _
    // Predicated region
    $region30: #{mlp_forward.1} parent=1 // pred_check
      _
    $region31: #{mlp_forward.1} parent=1 // pred_check_branch
      %57 = sbr.rel (0) target = $region33
    $region32: #{mlp_forward.1} parent=1 // pred_region
      %58 = dma.done [#allocation5], 1024
    $region33: #{mlp_forward.1} parent=1 // pred_fallthru
      _
    %v60 = vld [vmem:[#allocation2] sm:$0xff]
    %v61 = vpack.c.bf16 %v60, %v60
    %v62 = vld [vmem:[#allocation4] sm:$0xf]
    %v63 = vld [vmem:[#allocation4 + $0x4] sm:$0xf]
    %v64 = vld [vmem:[#allocation4 + $0x8] sm:$0xf]
    %v65 = vld [vmem:[#allocation4 + $0xc] sm:$0xf]
    %v66 = vld [vmem:[%s2] sm:$0x1]
    %v68 = vlaneseq
    %v69 = vshrl.u32 %v68, 7
    %v70 = vsub.s32 0, %v69
    %v71 = vrot.slane %v66, %v70
    %v77 = vunpack.c.l.b16 %v62
    %v78 = vunpack.c.l.b16 %v63
    %v79 = vunpack.c.l.b16 %v64
    %v80 = vunpack.c.l.b16 %v65
    %v81 = vpack.c.b16 %v78, %v77
    %v82 = vpack.c.b16 %v80, %v79
    %vm85 = vcmask 261120
    %v87 = vsel %vm85, %v61, 0
    %89 = vmatprep.subr.bf16.mxu0 0
    %90 = vmatpush1.bf16.msra.mxu0 0
    %91 = vmatprep.subr.bf16.mxu0 0
    %92 = vmatpush1.bf16.msra.mxu0 0
    %93 = vmatprep.subr.bf16.mxu0 0
    %94 = vmatpush1.bf16.msra.mxu0 0
    %95 = vmatprep.subr.bf16.mxu0 0
    %96 = vmatpush1.bf16.msra.mxu0 0
    %97 = vmatprep.subr.bf16.mxu0 0
    %98 = vmatpush1.bf16.msra.mxu0 0
    %99 = vmatprep.subr.bf16.mxu0 0
    %100 = vmatpush1.bf16.msra.mxu0 0
    %101 = vmatprep.subr.bf16.mxu0 0
    %102 = vmatpush1.bf16.msra.mxu0 %v82
    %103 = vmatprep.subr.bf16.mxu0 0
    %104 = vmatpush1.bf16.msra.mxu0 %v81
    %105 = vmatprep.subr.bf16.mxu0 0
    %106 = vmatpush2.bf16.msra.mxu0 0
    %107 = vmatprep.subr.bf16.mxu0 0
    %108 = vmatpush2.bf16.msra.mxu0 0
    %109 = vmatprep.subr.bf16.mxu0 0
    %110 = vmatpush2.bf16.msra.mxu0 0
    %111 = vmatprep.subr.bf16.mxu0 0
    %112 = vmatpush2.bf16.msra.mxu0 0
    %113 = vmatprep.subr.bf16.mxu0 0
    %114 = vmatpush2.bf16.msra.mxu0 0
    %115 = vmatprep.subr.bf16.mxu0 0
    %116 = vmatpush2.bf16.msra.mxu0 0
    %117 = vmatprep.subr.bf16.mxu0 0
    %118 = vmatpush2.bf16.msra.mxu0 0
    %119 = vmatprep.subr.bf16.mxu0 0
    %120 = vmatpush2.bf16.msra.mxu0 0
    %121 = vmatprep.mubr.bf16.mxu0 0
    %122 = vmatmul.mubr.bf16.gmra.mxu0 %v87
    %v123 = vpop.f32.mrf.mxu0
    %v124 = vadd.f32 %v71, %v123
    %v125 = vpop.f32.mrf.mxu0
    %v126 = vpop.f32.mrf.mxu0
    %v127 = vpop.f32.mrf.mxu0
    %128 = vdwg.mxu0
    %v129 = vtanh.pop %v124
    %v130 = vpack.c.bf16 %v129, %v129
    %v131 = vld [vmem:[#allocation6] sm:$0xf]
    %v132 = vld [vmem:[#allocation6 + $0x4] sm:$0xf]
    %v133 = vld [vmem:[#allocation6 + $0x8] sm:$0xf]
    %v134 = vld [vmem:[#allocation6 + $0xc] sm:$0xf]
    %v135 = vld [vmem:[#allocation6 + $0x10] sm:$0xf]
    %v136 = vld [vmem:[#allocation6 + $0x14] sm:$0xf]
    %v137 = vld [vmem:[#allocation6 + $0x18] sm:$0xf]
    %v138 = vld [vmem:[#allocation6 + $0x1c] sm:$0xf]
    %v139 = vld [vmem:[#allocation6 + $0x20] sm:$0xf]
    %v140 = vld [vmem:[#allocation6 + $0x24] sm:$0xf]
    %v141 = vld [vmem:[#allocation6 + $0x28] sm:$0xf]
    %v142 = vld [vmem:[#allocation6 + $0x2c] sm:$0xf]
    %v143 = vld [vmem:[#allocation6 + $0x30] sm:$0xf]
    %v144 = vld [vmem:[#allocation6 + $0x34] sm:$0xf]
    %v145 = vld [vmem:[#allocation6 + $0x38] sm:$0xf]
    %v146 = vld [vmem:[#allocation6 + $0x3c] sm:$0xf]
    %v147 = vld [vmem:[%s4] sm:$0x1]
    %v149 = vlaneseq
    %v150 = vshrl.u32 %v149, 7
    %v151 = vsub.s32 0, %v150
    %v152 = vrot.slane %v147, %v151
    %v170 = vunpack.c.l.b16 %v131
    %v171 = vunpack.c.l.b16 %v132
    %v172 = vunpack.c.l.b16 %v133
    %v173 = vunpack.c.l.b16 %v134
    %v174 = vunpack.c.l.b16 %v135
    %v175 = vunpack.c.l.b16 %v136
    %v176 = vunpack.c.l.b16 %v137
    %v177 = vunpack.c.l.b16 %v138
    %v178 = vunpack.c.l.b16 %v139
    %v179 = vunpack.c.l.b16 %v140
    %v180 = vunpack.c.l.b16 %v141
    %v181 = vunpack.c.l.b16 %v142
    %v182 = vunpack.c.l.b16 %v143
    %v183 = vunpack.c.l.b16 %v144
    %v184 = vunpack.c.l.b16 %v145
    %v185 = vunpack.c.l.b16 %v146
    %v186 = vpack.c.b16 %v171, %v170
    %v187 = vpack.c.b16 %v173, %v172
    %v188 = vpack.c.b16 %v175, %v174
    %v189 = vpack.c.b16 %v177, %v176
    %v190 = vpack.c.b16 %v179, %v178
    %v191 = vpack.c.b16 %v181, %v180
    %v192 = vpack.c.b16 %v183, %v182
    %v193 = vpack.c.b16 %v185, %v184
    %202 = vmatprep.subr.bf16.mxu0 0
    %203 = vmatpush1.bf16.msra.mxu0 %v193
    %204 = vmatprep.subr.bf16.mxu0 0
    %205 = vmatpush1.bf16.msra.mxu0 %v192
    %206 = vmatprep.subr.bf16.mxu0 0
    %207 = vmatpush1.bf16.msra.mxu0 %v191
    %208 = vmatprep.subr.bf16.mxu0 0
    %209 = vmatpush1.bf16.msra.mxu0 %v190
    %210 = vmatprep.subr.bf16.mxu0 0
    %211 = vmatpush1.bf16.msra.mxu0 %v189
    %212 = vmatprep.subr.bf16.mxu0 0
    %213 = vmatpush1.bf16.msra.mxu0 %v188
    %214 = vmatprep.subr.bf16.mxu0 0
    %215 = vmatpush1.bf16.msra.mxu0 %v187
    %216 = vmatprep.subr.bf16.mxu0 0
    %217 = vmatpush1.bf16.msra.mxu0 %v186
    %218 = vmatprep.subr.bf16.mxu0 0
    %219 = vmatpush2.bf16.msra.mxu0 0
    %220 = vmatprep.subr.bf16.mxu0 0
    %221 = vmatpush2.bf16.msra.mxu0 0
    %222 = vmatprep.subr.bf16.mxu0 0
    %223 = vmatpush2.bf16.msra.mxu0 0
    %224 = vmatprep.subr.bf16.mxu0 0
    %225 = vmatpush2.bf16.msra.mxu0 0
    %226 = vmatprep.subr.bf16.mxu0 0
    %227 = vmatpush2.bf16.msra.mxu0 0
    %228 = vmatprep.subr.bf16.mxu0 0
    %229 = vmatpush2.bf16.msra.mxu0 0
    %230 = vmatprep.subr.bf16.mxu0 0
    %231 = vmatpush2.bf16.msra.mxu0 0
    %232 = vmatprep.subr.bf16.mxu0 0
    %233 = vmatpush2.bf16.msra.mxu0 0
    %234 = vmatprep.mubr.bf16.mxu0 0
    %235 = vmatmul.mubr.bf16.gmra.mxu0 %v130
    %v236 = vpop.f32.mrf.mxu0
    %v237 = vadd.f32 %v152, %v236
    %v238 = vpop.f32.mrf.mxu0
    %v239 = vpop.f32.mrf.mxu0
    %v240 = vpop.f32.mrf.mxu0
    %241 = vdwg.mxu0
    %242 = vmax.xlane.f32.xlu0 %v237
    %v243 = vpop.xlane.xlu0 %242
    %v244 = vsub.f32 %v237, %v243
    %v245 = vmul.f32 %v244, 1.442695
    %v246 = vpow.pop %v245
    %247 = vadd.xlane.f32.xlu0 %v246
    %v248 = vpop.xlane.xlu0 %247
    %v249 = vlog2.pop %v248
    %v250 = vmul.f32 %v249, 0.6931472
    %v251 = vsub.f32 %v244, %v250
    %252 = vst [vmem:[%s5] sm:$0xff] %v251
    // Predicated region
    $region34: #{mlp_forward.1} parent=1 // pred_check
      _
    $region35: #{mlp_forward.1} parent=1 // pred_check_branch
      %254 = sbr.rel (0) target = $region37
    $region36: #{mlp_forward.1} parent=1 // pred_region
      _
    $region37: #{mlp_forward.1} parent=1 // pred_fallthru
      _
    // Predicated region
    $region38: #{mlp_forward.1} parent=1 // pred_check
      _
    $region39: #{mlp_forward.1} parent=1 // pred_check_branch
      %256 = sbr.rel (0) target = $region41
    $region40: #{mlp_forward.1} parent=1 // pred_region
      _
    $region41: #{mlp_forward.1} parent=1 // pred_fallthru
      _
    %257 = vsyncpa [#allocation3], 1
    %258 = vsyncpa [#allocation5], 1

</llo_original>
